<compile_context>
chip_gen: v6e
topology: v6e:2x2x1
jax: 0.10.0
libtpu: 0.0.40
codegen_flags: <defaults>
</compile_context>

<pallas_src>
import functools

import jax
import jax.numpy as jnp
from jax import lax
from jax.experimental import pallas as pl
from jax.experimental.pallas import tpu as pltpu


# ---------------------------------------------------------------------------
# Helpers
# ---------------------------------------------------------------------------
def _round_up(n, m):
    return ((n + m - 1) // m) * m


_ROLL_SIGN = None  # +1/-1: pltpu.roll usable (sign giving output[t] = input[t-s]); 0: fallback


def _probe_roll():
    """Verify pltpu.roll lowers for a (batch, time, lane) sublane rotation and learn
    its rotation direction.  Returns +1 / -1 if usable, 0 to use a concat fallback."""
    global _ROLL_SIGN
    if _ROLL_SIGN is not None:
        return _ROLL_SIGN
    try:
        def _k(x_ref, o_ref):
            o_ref[...] = pltpu.roll(x_ref[...], 1, axis=1)

        x = jnp.tile(jnp.arange(16, dtype=jnp.float32)[None, :, None], (2, 1, 128))
        y = jax.block_until_ready(
            pl.pallas_call(_k, out_shape=jax.ShapeDtypeStruct(x.shape, x.dtype))(x))
        if bool(jnp.array_equal(y, jnp.roll(x, 1, axis=1))):
            _ROLL_SIGN = 1
        elif bool(jnp.array_equal(y, jnp.roll(x, -1, axis=1))):
            _ROLL_SIGN = -1
        else:
            _ROLL_SIGN = 0
    except Exception:
        _ROLL_SIGN = 0
    return _ROLL_SIGN


def _vmem_budget_bytes():
    """Generation-aware VMEM budget (v7x: 64 MiB/TC, v5e/v6e: 128 MiB)."""
    cap = None
    try:
        cap = int(getattr(pltpu.get_tpu_info(), "vmem_capacity_bytes", 0)) or None
    except Exception:
        cap = None
    if cap is None:
        cap = 64 * 1024 * 1024          # conservative fallback == v7x physical size
    return int(cap * 0.8)


def _batch_blocks(B):
    """Shard the batch across TensorCores on multi-TC chips; 1 block elsewhere."""
    try:
        kind = jax.devices()[0].device_kind.lower()
    except Exception:
        return 1
    multi_tc = any(tag in kind for tag in ("v7", "tpu7", "v4", "v5p"))
    return 2 if (multi_tc and B % 2 == 0) else 1


def _pick_time_chunk(T, footprint, budget, max_chunk=128):
    """Largest time chunk that divides T, keeps blocks sublane-aligned and fits the
    VMEM budget (per-grid-step overhead ~0.35 us, so bigger is better)."""
    cands = [c for c in range(min(T, max_chunk), 0, -1)
             if T % c == 0 and (c % 8 == 0 or c == T)]
    if not cands:
        return T
    for c in cands:
        if footprint(c) <= budget:
            return c
    return cands[-1]


# ---------------------------------------------------------------------------
# Fused SRU layer kernel (skewed pipeline step):
#   Stage B: log-depth scan recurrence + output mix for time-chunk (ct - 1)
#   Stage A: MXU projection + gate sigmoids for time-chunk ct
# The stages use opposite slots of the double-buffered gate scratch and are data
# independent, so the scheduler overlaps MXU/EUP work (A) with the VPU/XLU scan (B).
# At ct == 0 stage B consumes uninitialized scratch: its h block is fully rewritten at
# ct == 1 before write-back and its carry write is masked out, so nothing leaks.  At
# ct == num_chunks stage A recomputes the last chunk into a slot that is never read.
# ---------------------------------------------------------------------------
def _sru_fused_kernel(x_ref, w_ref, b_ref, h_ref,
                      c_ref, f_buf, fx_buf, r_buf, s_buf,
                      *, D, TT, k, roll_sign):
    ct = pl.program_id(1)
    slot = ct % 2                     # gate slot written by this step's projection
    prev = 1 - slot                   # gate slot consumed by this step's recurrence
    TB = x_ref.shape[0]
    d_in = x_ref.shape[2]

    # ----------------- Stage B: recurrence + epilogue for chunk ct - 1 -----------------
    f = f_buf[prev]                   # (TB, TT, D)  forget gate sigmoid
    fx = fx_buf[prev]                 # (TB, TT, D)  (1 - f) * x_tilde
    rows = (lax.broadcasted_iota(jnp.int32, (TB, TT, D), 1)
            if roll_sign != 0 else None)

    def shifted(a, s, fill):
        # `a` shifted by +s along the time axis; first s rows = fill (scan identity).
        if roll_sign != 0:
            amt = s if roll_sign > 0 else TT - s
            return jnp.where(rows >= s, pltpu.roll(a, amt, axis=1), fill)
        pad = jnp.full((TB, s, D), fill, a.dtype)
        return jnp.concatenate([pad, a[:, :TT - s, :]], axis=1)

    # Hillis-Steele inclusive scan of the affine maps c -> f * c + fx (log2(TT) levels,
    # full-width VPU passes; the shifts run on the XLU, off the VALU slot).
    s = 1
    while s < TT:
        fx_s = shifted(fx, s, 0.0)
        f_s = shifted(f, s, 1.0)
        fx = fx + f * fx_s
        f = f * f_s
        s *= 2

    # chunk-entry carry: zero for the first real chunk (ct == 1)
    c_prev = jnp.where(ct > 1, c_ref[...], 0.0)            # (TB, 1, D)
    c_chunk = f * c_prev + fx                               # (TB, TT, D)
    c_ref[...] = c_chunk[:, TT - 1:TT, :]
    r = r_buf[prev]
    skip = s_buf[prev]
    h_ref[...] = (r * jnp.tanh(c_chunk) + (1.0 - r) * skip).astype(h_ref.dtype)

    # ----------------- Stage A: projection + gate math for chunk ct -----------------
    x = x_ref[...]                                          # (TB, TT, d_in)
    x2 = x.reshape(TB * TT, d_in).astype(w_ref.dtype)
    xt = jnp.dot(x2, w_ref[0], preferred_element_type=jnp.float32)
    fg = jax.nn.sigmoid(
        jnp.dot(x2, w_ref[1], preferred_element_type=jnp.float32) + b_ref[0])
    rg = jax.nn.sigmoid(
        jnp.dot(x2, w_ref[2], preferred_element_type=jnp.float32) + b_ref[1])
    f_buf[slot] = fg.reshape(TB, TT, D)
    fx_buf[slot] = ((1.0 - fg) * xt).reshape(TB, TT, D)
    r_buf[slot] = rg.reshape(TB, TT, D)
    if k == 3:
        s_buf[slot] = x.astype(jnp.float32)                 # skip term = raw layer input
    else:
        s_buf[slot] = jnp.dot(
            x2, w_ref[3], preferred_element_type=jnp.float32).reshape(TB, TT, D)


def sru_layer_fused(x, Wk, bk, out_dtype):
    """One fused SRU layer.
    x:  (B, T, d_in_pad) layer input (lane-dense / padded)
    Wk: (k, d_in_pad, D_pad) bf16 per-gate weights (VMEM resident)
    bk: (2, 1, D_pad) f32 forget / reset gate biases
    returns (B, T, D_pad) in `out_dtype`.
    """
    B, T, d_in = x.shape
    k, _, Dp = Wk.shape
    nb = _batch_blocks(B)
    TB = B // nb
    budget = _vmem_budget_bytes()
    x_bytes = jnp.dtype(x.dtype).itemsize
    out_bytes = jnp.dtype(out_dtype).itemsize

    def footprint(tt):
        gate = TB * tt * Dp * 4
        est = (2 * TB * tt * d_in * x_bytes            # double-buffered x blocks
               + 2 * TB * tt * Dp * out_bytes          # double-buffered h blocks
               + 2 * (k * d_in * Dp * 2 + 2 * Dp * 4)  # resident W (bf16) + biases (f32)
               + TB * Dp * 4                           # carried cell state
               + 8 * gate                              # 4 double-buffered gate buffers
               + 14 * gate                             # matmul outputs + scan temporaries
               + 2 * TB * tt * d_in * 4)               # cast / reshape temp
        return int(est * 1.25)

    TT = _pick_time_chunk(T, footprint, budget)
    nct = T // TT
    vmem_bytes = int(min(budget, max(2 * footprint(TT), 32 * 1024 * 1024)))

    kernel = functools.partial(_sru_fused_kernel, D=Dp, TT=TT, k=k,
                               roll_sign=_probe_roll())

    return pl.pallas_call(
        kernel,
        out_shape=jax.ShapeDtypeStruct((B, T, Dp), out_dtype),
        grid=(nb, nct + 1),            # +1: projection runs one chunk ahead (skew)
        in_specs=[
            # x chunk for stage A (current chunk); clamped on the tail step
            pl.BlockSpec((TB, TT, d_in),
                         lambda bi, ct: (bi, jnp.minimum(ct, nct - 1), 0)),
            # per-gate weights / biases: constant index map => fetched once, resident
            pl.BlockSpec((k, d_in, Dp), lambda bi, ct: (0, 0, 0)),
            pl.BlockSpec((2, 1, Dp), lambda bi, ct: (0, 0, 0)),
        ],
        # h block for stage B (previous chunk)
        out_specs=pl.BlockSpec((TB, TT, Dp),
                               lambda bi, ct: (bi, jnp.maximum(ct - 1, 0), 0)),
        scratch_shapes=[
            pltpu.VMEM((TB, 1, Dp), jnp.float32),        # carried cell state c
            pltpu.VMEM((2, TB, TT, Dp), jnp.float32),    # f            (double-buffered)
            pltpu.VMEM((2, TB, TT, Dp), jnp.float32),    # (1 - f) * x_tilde
            pltpu.VMEM((2, TB, TT, Dp), jnp.float32),    # r
            pltpu.VMEM((2, TB, TT, Dp), jnp.float32),    # skip term
        ],
        compiler_params=pltpu.CompilerParams(
            dimension_semantics=("parallel", "arbitrary"),
            vmem_limit_bytes=vmem_bytes,
        ),
        cost_estimate=pl.CostEstimate(
            flops=2 * B * T * d_in * k * Dp,
            transcendentals=3 * B * T * Dp,
            bytes_accessed=(B * T * d_in * x_bytes + B * T * Dp * out_bytes
                            + Wk.size * 2 + bk.size * 4),
        ),
    )(x, Wk, bk)


# ---------------------------------------------------------------------------
# SruEmb parameters + forward (glue in plain JAX), batch-major end-to-end.
# ---------------------------------------------------------------------------
def init_sru_params(key, nb_layer, dim_in, dim_out):
    """Logical (unpadded) SRU v1 parameters, mirroring the PyTorch initialization."""
    params = []
    d_in = dim_in
    for _ in range(nb_layer):
        k = 3 if d_in == dim_out else 4
        key, wk, bk = jax.random.split(key, 3)
        val = (3.0 / d_in) ** 0.5
        W = jax.random.uniform(wk, (d_in, dim_out * k), jnp.float32, -val, val)
        b = 0.1 * jax.random.normal(bk, (2 * dim_out,), jnp.float32)
        params.append((W, b))
        d_in = dim_out
    return params


def prep_kernel_params(params, dim_out):
    """Pad to lane-dense (multiple-of-128) shapes and split the projection per gate:
    W (d_in, k*D) -> (k, d_in_pad, D_pad) bf16, b (2*D) -> (2, 1, D_pad) f32.
    Zero padding keeps padded columns exactly zero through every layer."""
    D = dim_out
    Dp = _round_up(D, 128)
    out = []
    for W, b in params:
        d_in, kD = W.shape
        k = kD // D
        dp = _round_up(d_in, 128)
        Wg = jnp.transpose(W.reshape(d_in, k, D), (1, 0, 2))        # (k, d_in, D)
        Wp = jnp.zeros((k, dp, Dp), jnp.float32).at[:, :d_in, :D].set(Wg)
        bp = (jnp.zeros((2, 1, Dp), jnp.float32)
              .at[0, 0, :D].set(b[:D])
              .at[1, 0, :D].set(b[D:]))
        out.append((Wp.astype(jnp.bfloat16), bp))
    return out, Dp


def sru_emb_forward(x, params, dim_out):
    """SruEmb.forward: (B, T, dim_in) -> (B, T, dim_out).  Batch-major throughout,
    so the PyTorch permute(1, 0, 2) / permute-back pair is folded away."""
    B, T, dim_in = x.shape
    kparams, Dp = prep_kernel_params(params, dim_out)
    d_in0 = kparams[0][0].shape[1]
    h = jnp.pad(x.astype(jnp.float32), ((0, 0), (0, 0), (0, d_in0 - dim_in)))
    n = len(kparams)
    for li, (Wk, bk) in enumerate(kparams):
        # intermediate activations in bf16 (halves HBM traffic), final layer in f32
        out_dtype = jnp.float32 if li == n - 1 else jnp.bfloat16
        h = sru_layer_fused(h, Wk, bk, out_dtype)
    return h[:, :, :dim_out]


# ---------------------------------------------------------------------------
# Pure-JAX sequential reference (same dtype policy) for the sanity check
# ---------------------------------------------------------------------------
def sru_emb_ref(x, params, dim_out):
    B, T, _ = x.shape
    D = dim_out
    h = x.astype(jnp.float32)
    n = len(params)
    for li, (W, b) in enumerate(params):
        d_in, kD = W.shape
        k = kD // D
        b_full = jnp.zeros((kD,), jnp.float32).at[D:3 * D].set(b)
        u = jnp.dot(h.reshape(B * T, d_in).astype(jnp.bfloat16),
                    W.astype(jnp.bfloat16),
                    preferred_element_type=jnp.float32) + b_full
        u = u.reshape(B, T, kD)
        u_t = jnp.transpose(u, (1, 0, 2))                    # (T, B, kD)
        x_t = jnp.transpose(h.astype(jnp.float32), (1, 0, 2))

        def step(c, inp):
            u_i, x_i = inp
            x_tilde = u_i[:, :D]
            f = jax.nn.sigmoid(u_i[:, D:2 * D])
            r = jax.nn.sigmoid(u_i[:, 2 * D:3 * D])
            c_new = f * c + (1.0 - f) * x_tilde
            skip = x_i if k == 3 else u_i[:, 3 * D:4 * D]
            h_i = r * jnp.tanh(c_new) + (1.0 - r) * skip
            return c_new, h_i

        c0 = jnp.zeros((B, D), jnp.float32)
        _, hs = jax.lax.scan(step, c0, (u_t, x_t))
        h = jnp.transpose(hs, (1, 0, 2))                     # (B, T, D)
        if li < n - 1:
            h = h.astype(jnp.bfloat16)                       # match kernel storage dtype
    return h


if __name__ == "__main__":
    batch, seq, dim_in, dim_out, nb_layer = 2, 8, 16, 32, 2
    key = jax.random.PRNGKey(0)
    kx, kp = jax.random.split(key)
    x = jax.random.normal(kx, (batch, seq, dim_in), jnp.float32)
    params = init_sru_params(kp, nb_layer, dim_in, dim_out)

    out = jax.block_until_ready(sru_emb_forward(x, params, dim_out))
    assert out.shape == (batch, seq, dim_out), out.shape

    ref = jax.block_until_ready(sru_emb_ref(x, params, dim_out))
    err = float(jnp.max(jnp.abs(out - ref)))
    assert jnp.allclose(out, ref, rtol=2e-2, atol=2e-2), f"max_abs_err={err}"

    print("KERNEL_OK")
</pallas_src>

<mosaic_0001>
module attributes {stable_mosaic.version = 11 : i64} {
  func.func @_k(%arg0: memref<2x16x128xf32, #tpu.memory_space<vmem>>, %arg1: memref<2x16x128xf32, #tpu.memory_space<vmem>>) attributes {dimension_semantics = [], scalar_prefetch = 0 : i64, scratch_operands = 0 : i64, tpu.core_type = #tpu.core_type<tc>} {
    %c0 = arith.constant 0 : index
    %c0_0 = arith.constant 0 : index
    %c0_1 = arith.constant 0 : index
    %0 = vector.load %arg0[%c0, %c0_0, %c0_1] : memref<2x16x128xf32, #tpu.memory_space<vmem>>, vector<2x16x128xf32>
    %c1_i32 = arith.constant 1 : i32
    %1 = tpu.dynamic_rotate %0 by %c1_i32 dim 1 : vector<2x16x128xf32>, i32 -> vector<2x16x128xf32>
    %c0_2 = arith.constant 0 : index
    %c0_3 = arith.constant 0 : index
    %c0_4 = arith.constant 0 : index
    %2 = vector.load %arg1[%c0_2, %c0_3, %c0_4] : memref<2x16x128xf32, #tpu.memory_space<vmem>>, vector<2x16x128xf32>
    tpu.vector_store %arg1[%c0_2, %c0_3, %c0_4], %1 {strides = array<i32>} : memref<2x16x128xf32, #tpu.memory_space<vmem>>, vector<2x16x128xf32>,
    return
  }
}

module attributes {stable_mosaic.version = 11 : i64} {
  func.func @_sru_fused_kernel(%arg0: i32, %arg1: i32, %arg2: memref<2x8x128xf32, #tpu.memory_space<vmem>>, %arg3: memref<4x128x128xbf16, #tpu.memory_space<vmem>>, %arg4: memref<2x1x128xf32, #tpu.memory_space<vmem>>, %arg5: memref<2x8x128xbf16, #tpu.memory_space<vmem>>, %arg6: memref<2x1x128xf32, #tpu.memory_space<vmem>>, %arg7: memref<2x2x8x128xf32, #tpu.memory_space<vmem>>, %arg8: memref<2x2x8x128xf32, #tpu.memory_space<vmem>>, %arg9: memref<2x2x8x128xf32, #tpu.memory_space<vmem>>, %arg10: memref<2x2x8x128xf32, #tpu.memory_space<vmem>>) attributes {dimension_semantics = [#tpu.dimension_semantics<parallel>, #tpu.dimension_semantics<arbitrary>], iteration_bounds = array<i64: 1, 2>, scalar_prefetch = 0 : i64, scratch_operands = 5 : i64, tpu.core_type = #tpu.core_type<tc>, window_params = [{transform_indices = @transform_0, window_bounds = array<i64: 2, 8, 128>}, {pipeline_mode = #tpu.pipeline_mode<synchronous>, transform_indices = @transform_1, window_bounds = array<i64: 4, 128, 128>}, {pipeline_mode = #tpu.pipeline_mode<synchronous>, transform_indices = @transform_2, window_bounds = array<i64: 2, 1, 128>}, {transform_indices = @transform_3, window_bounds = array<i64: 2, 8, 128>}]} {
    %c2_i32 = arith.constant 2 : i32
    %c0_i32 = arith.constant 0 : i32
    %0 = arith.cmpi eq, %c2_i32, %c0_i32 : i32
    %c1_i32 = arith.constant 1 : i32
    %1 = arith.select %0, %c1_i32, %c2_i32 : i32
    %2 = arith.remsi %arg1, %1 : i32
    %c0_i32_0 = arith.constant 0 : i32
    %3 = arith.cmpi ne, %2, %c0_i32_0 : i32
    %c0_i32_1 = arith.constant 0 : i32
    %4 = arith.cmpi slt, %2, %c0_i32_1 : i32
    %c0_i32_2 = arith.constant 0 : i32
    %5 = arith.cmpi slt, %1, %c0_i32_2 : i32
    %6 = arith.xori %4, %5 : i1
    %7 = arith.andi %6, %3 : i1
    %8 = arith.addi %2, %1 : i32
    %9 = arith.select %7, %8, %2 : i32
    %c1_i32_3 = arith.constant 1 : i32
    %10 = arith.subi %c1_i32_3, %9 : i32
    %11 = arith.index_cast %10 : i32 to index
    %c0 = arith.constant 0 : index
    %c0_4 = arith.constant 0 : index
    %c0_5 = arith.constant 0 : index
    %12 = vector.load %arg7[%11, %c0, %c0_4, %c0_5] : memref<2x2x8x128xf32, #tpu.memory_space<vmem>>, vector<1x2x8x128xf32>
    %13 = vector.shape_cast %12 : vector<1x2x8x128xf32> to vector<2x8x128xf32>
    %14 = arith.index_cast %10 : i32 to index
    %c0_6 = arith.constant 0 : index
    %c0_7 = arith.constant 0 : index
    %c0_8 = arith.constant 0 : index
    %15 = vector.load %arg8[%14, %c0_6, %c0_7, %c0_8] : memref<2x2x8x128xf32, #tpu.memory_space<vmem>>, vector<1x2x8x128xf32>
    %16 = vector.shape_cast %15 : vector<1x2x8x128xf32> to vector<2x8x128xf32>
    %cst = arith.constant 0.000000e+00 : f32
    %17 = vector.broadcast %cst : f32 to vector<2x1x128xf32>
    %18 = vector.extract_strided_slice %16 {offsets = [0, 0, 0], sizes = [2, 7, 128], strides = [1, 1, 1]} : vector<2x8x128xf32> to vector<2x7x128xf32>
    %19 = tpu.concatenate %17, %18 in 1 : vector<2x1x128xf32>, vector<2x7x128xf32> -> vector<2x8x128xf32>
    %cst_9 = arith.constant 1.000000e+00 : f32
    %20 = vector.broadcast %cst_9 : f32 to vector<2x1x128xf32>
    %21 = vector.extract_strided_slice %13 {offsets = [0, 0, 0], sizes = [2, 7, 128], strides = [1, 1, 1]} : vector<2x8x128xf32> to vector<2x7x128xf32>
    %22 = tpu.concatenate %20, %21 in 1 : vector<2x1x128xf32>, vector<2x7x128xf32> -> vector<2x8x128xf32>
    %23 = arith.mulf %13, %19 : vector<2x8x128xf32>
    %24 = arith.addf %16, %23 : vector<2x8x128xf32>
    %25 = arith.mulf %13, %22 : vector<2x8x128xf32>
    %cst_10 = arith.constant 0.000000e+00 : f32
    %26 = vector.broadcast %cst_10 : f32 to vector<2x2x128xf32>
    %27 = vector.extract_strided_slice %24 {offsets = [0, 0, 0], sizes = [2, 6, 128], strides = [1, 1, 1]} : vector<2x8x128xf32> to vector<2x6x128xf32>
    %28 = tpu.concatenate %26, %27 in 1 : vector<2x2x128xf32>, vector<2x6x128xf32> -> vector<2x8x128xf32>
    %cst_11 = arith.constant 1.000000e+00 : f32
    %29 = vector.broadcast %cst_11 : f32 to vector<2x2x128xf32>
    %30 = vector.extract_strided_slice %25 {offsets = [0, 0, 0], sizes = [2, 6, 128], strides = [1, 1, 1]} : vector<2x8x128xf32> to vector<2x6x128xf32>
    %31 = tpu.concatenate %29, %30 in 1 : vector<2x2x128xf32>, vector<2x6x128xf32> -> vector<2x8x128xf32>
    %32 = arith.mulf %25, %28 : vector<2x8x128xf32>
    %33 = arith.addf %24, %32 : vector<2x8x128xf32>
    %34 = arith.mulf %25, %31 : vector<2x8x128xf32>
    %cst_12 = arith.constant 0.000000e+00 : f32
    %35 = vector.broadcast %cst_12 : f32 to vector<2x4x128xf32>
    %36 = vector.extract_strided_slice %33 {offsets = [0, 0, 0], sizes = [2, 4, 128], strides = [1, 1, 1]} : vector<2x8x128xf32> to vector<2x4x128xf32>
    %37 = tpu.concatenate %35, %36 in 1 : vector<2x4x128xf32>, vector<2x4x128xf32> -> vector<2x8x128xf32>
    %cst_13 = arith.constant 1.000000e+00 : f32
    %38 = vector.broadcast %cst_13 : f32 to vector<2x4x128xf32>
    %39 = vector.extract_strided_slice %34 {offsets = [0, 0, 0], sizes = [2, 4, 128], strides = [1, 1, 1]} : vector<2x8x128xf32> to vector<2x4x128xf32>
    %40 = tpu.concatenate %38, %39 in 1 : vector<2x4x128xf32>, vector<2x4x128xf32> -> vector<2x8x128xf32>
    %41 = arith.mulf %34, %37 : vector<2x8x128xf32>
    %42 = arith.addf %33, %41 : vector<2x8x128xf32>
    %43 = arith.mulf %34, %40 : vector<2x8x128xf32>
    %c1_i32_14 = arith.constant 1 : i32
    %44 = arith.cmpi sgt, %arg1, %c1_i32_14 : i32
    %c0_15 = arith.constant 0 : index
    %c0_16 = arith.constant 0 : index
    %c0_17 = arith.constant 0 : index
    %45 = vector.load %arg6[%c0_15, %c0_16, %c0_17] : memref<2x1x128xf32, #tpu.memory_space<vmem>>, vector<2x1x128xf32>
    %cst_18 = arith.constant 0.000000e+00 : f32
    %46 = vector.broadcast %cst_18 : f32 to vector<2x1x128xf32>
    %47 = arith.select %44, %45, %46 : vector<2x1x128xf32>
    %48 = vector.broadcast %47 : vector<2x1x128xf32> to vector<2x8x128xf32>
    %49 = arith.mulf %43, %48 : vector<2x8x128xf32>
    %50 = arith.addf %49, %42 : vector<2x8x128xf32>
    %51 = vector.extract_strided_slice %50 {offsets = [0, 7, 0], sizes = [2, 1, 128], strides = [1, 1, 1]} : vector<2x8x128xf32> to vector<2x1x128xf32>
    %c0_19 = arith.constant 0 : index
    %c0_20 = arith.constant 0 : index
    %c0_21 = arith.constant 0 : index
    %52 = vector.load %arg6[%c0_19, %c0_20, %c0_21] : memref<2x1x128xf32, #tpu.memory_space<vmem>>, vector<2x1x128xf32>
    tpu.vector_store %arg6[%c0_19, %c0_20, %c0_21], %51 {strides = array<i32>} : memref<2x1x128xf32, #tpu.memory_space<vmem>>, vector<2x1x128xf32>,
    %53 = arith.index_cast %10 : i32 to index
    %c0_22 = arith.constant 0 : index
    %c0_23 = arith.constant 0 : index
    %c0_24 = arith.constant 0 : index
    %54 = vector.load %arg9[%53, %c0_22, %c0_23, %c0_24] : memref<2x2x8x128xf32, #tpu.memory_space<vmem>>, vector<1x2x8x128xf32>
    %55 = vector.shape_cast %54 : vector<1x2x8x128xf32> to vector<2x8x128xf32>
    %56 = arith.index_cast %10 : i32 to index
    %c0_25 = arith.constant 0 : index
    %c0_26 = arith.constant 0 : index
    %c0_27 = arith.constant 0 : index
    %57 = vector.load %arg10[%56, %c0_25, %c0_26, %c0_27] : memref<2x2x8x128xf32, #tpu.memory_space<vmem>>, vector<1x2x8x128xf32>
    %58 = vector.shape_cast %57 : vector<1x2x8x128xf32> to vector<2x8x128xf32>
    %59 = math.tanh %50 : vector<2x8x128xf32>
    %60 = arith.mulf %55, %59 : vector<2x8x128xf32>
    %cst_28 = arith.constant 1.000000e+00 : f32
    %61 = vector.broadcast %cst_28 : f32 to vector<2x8x128xf32>
    %62 = arith.subf %61, %55 : vector<2x8x128xf32>
    %63 = arith.mulf %62, %58 : vector<2x8x128xf32>
    %64 = arith.addf %60, %63 : vector<2x8x128xf32>
    %65 = arith.truncf %64 : vector<2x8x128xf32> to vector<2x8x128xbf16>
    %c0_29 = arith.constant 0 : index
    %c0_30 = arith.constant 0 : index
    %c0_31 = arith.constant 0 : index
    %66 = vector.load %arg5[%c0_29, %c0_30, %c0_31] : memref<2x8x128xbf16, #tpu.memory_space<vmem>>, vector<2x8x128xbf16>
    tpu.vector_store %arg5[%c0_29, %c0_30, %c0_31], %65 {strides = array<i32>} : memref<2x8x128xbf16, #tpu.memory_space<vmem>>, vector<2x8x128xbf16>,
    %c0_32 = arith.constant 0 : index
    %c0_33 = arith.constant 0 : index
    %c0_34 = arith.constant 0 : index
    %67 = vector.load %arg2[%c0_32, %c0_33, %c0_34] : memref<2x8x128xf32, #tpu.memory_space<vmem>>, vector<2x8x128xf32>
    %68 = vector.shape_cast %67 : vector<2x8x128xf32> to vector<16x128xf32>
    %69 = arith.truncf %68 : vector<16x128xf32> to vector<16x128xbf16>
    %c0_35 = arith.constant 0 : index
    %c0_36 = arith.constant 0 : index
    %c0_37 = arith.constant 0 : index
    %70 = vector.load %arg3[%c0_35, %c0_36, %c0_37] : memref<4x128x128xbf16, #tpu.memory_space<vmem>>, vector<1x128x128xbf16>
    %71 = vector.shape_cast %70 : vector<1x128x128xbf16> to vector<128x128xbf16>
    %cst_38 = arith.constant dense<0.000000e+00> : vector<16x128xf32>
    %72 = tpu.matmul %69, %71, %cst_38 {dimension_numbers = #tpu.dot_dimension_numbers<[1], [0], [0], [1], [0, 0, 1, 1], [], []>} : vector<16x128xbf16>, vector<128x128xbf16>, vector<16x128xf32> -> vector<16x128xf32>
    %c1 = arith.constant 1 : index
    %c0_39 = arith.constant 0 : index
    %c0_40 = arith.constant 0 : index
    %73 = vector.load %arg3[%c1, %c0_39, %c0_40] : memref<4x128x128xbf16, #tpu.memory_space<vmem>>, vector<1x128x128xbf16>
    %74 = vector.shape_cast %73 : vector<1x128x128xbf16> to vector<128x128xbf16>
    %cst_41 = arith.constant dense<0.000000e+00> : vector<16x128xf32>
    %75 = tpu.matmul %69, %74, %cst_41 {dimension_numbers = #tpu.dot_dimension_numbers<[1], [0], [0], [1], [0, 0, 1, 1], [], []>} : vector<16x128xbf16>, vector<128x128xbf16>, vector<16x128xf32> -> vector<16x128xf32>
    %c0_42 = arith.constant 0 : index
    %c0_43 = arith.constant 0 : index
    %c0_44 = arith.constant 0 : index
    %76 = vector.load %arg4[%c0_42, %c0_43, %c0_44] : memref<2x1x128xf32, #tpu.memory_space<vmem>>, vector<1x1x128xf32>
    %77 = vector.shape_cast %76 : vector<1x1x128xf32> to vector<1x128xf32>
    %78 = vector.broadcast %77 : vector<1x128xf32> to vector<16x128xf32>
    %79 = arith.addf %75, %78 : vector<16x128xf32>
    %80 = arith.negf %79 : vector<16x128xf32>
    %81 = math.exp %80 : vector<16x128xf32>
    %cst_45 = arith.constant 1.000000e+00 : f32
    %82 = vector.broadcast %cst_45 : f32 to vector<16x128xf32>
    %83 = arith.addf %82, %81 : vector<16x128xf32>
    %84 = arith.divf %82, %83 : vector<16x128xf32>
    %c2 = arith.constant 2 : index
    %c0_46 = arith.constant 0 : index
    %c0_47 = arith.constant 0 : index
    %85 = vector.load %arg3[%c2, %c0_46, %c0_47] : memref<4x128x128xbf16, #tpu.memory_space<vmem>>, vector<1x128x128xbf16>
    %86 = vector.shape_cast %85 : vector<1x128x128xbf16> to vector<128x128xbf16>
    %cst_48 = arith.constant dense<0.000000e+00> : vector<16x128xf32>
    %87 = tpu.matmul %69, %86, %cst_48 {dimension_numbers = #tpu.dot_dimension_numbers<[1], [0], [0], [1], [0, 0, 1, 1], [], []>} : vector<16x128xbf16>, vector<128x128xbf16>, vector<16x128xf32> -> vector<16x128xf32>
    %c1_49 = arith.constant 1 : index
    %c0_50 = arith.constant 0 : index
    %c0_51 = arith.constant 0 : index
    %88 = vector.load %arg4[%c1_49, %c0_50, %c0_51] : memref<2x1x128xf32, #tpu.memory_space<vmem>>, vector<1x1x128xf32>
    %89 = vector.shape_cast %88 : vector<1x1x128xf32> to vector<1x128xf32>
    %90 = vector.broadcast %89 : vector<1x128xf32> to vector<16x128xf32>
    %91 = arith.addf %87, %90 : vector<16x128xf32>
    %92 = arith.negf %91 : vector<16x128xf32>
    %93 = math.exp %92 : vector<16x128xf32>
    %cst_52 = arith.constant 1.000000e+00 : f32
    %94 = vector.broadcast %cst_52 : f32 to vector<16x128xf32>
    %95 = arith.addf %94, %93 : vector<16x128xf32>
    %96 = arith.divf %94, %95 : vector<16x128xf32>
    %97 = vector.shape_cast %84 : vector<16x128xf32> to vector<2x8x128xf32>
    %98 = arith.index_cast %9 : i32 to index
    %c0_53 = arith.constant 0 : index
    %c0_54 = arith.constant 0 : index
    %c0_55 = arith.constant 0 : index
    %99 = vector.load %arg7[%98, %c0_53, %c0_54, %c0_55] : memref<2x2x8x128xf32, #tpu.memory_space<vmem>>, vector<1x2x8x128xf32>
    %100 = vector.shape_cast %99 : vector<1x2x8x128xf32> to vector<2x8x128xf32>
    %101 = vector.shape_cast %97 : vector<2x8x128xf32> to vector<1x2x8x128xf32>
    tpu.vector_store %arg7[%98, %c0_53, %c0_54, %c0_55], %101 {strides = array<i32>} : memref<2x2x8x128xf32, #tpu.memory_space<vmem>>, vector<1x2x8x128xf32>,
    %cst_56 = arith.constant 1.000000e+00 : f32
    %102 = vector.broadcast %cst_56 : f32 to vector<16x128xf32>
    %103 = arith.subf %102, %84 : vector<16x128xf32>
    %104 = arith.mulf %103, %72 : vector<16x128xf32>
    %105 = vector.shape_cast %104 : vector<16x128xf32> to vector<2x8x128xf32>
    %106 = arith.index_cast %9 : i32 to index
    %c0_57 = arith.constant 0 : index
    %c0_58 = arith.constant 0 : index
    %c0_59 = arith.constant 0 : index
    %107 = vector.load %arg8[%106, %c0_57, %c0_58, %c0_59] : memref<2x2x8x128xf32, #tpu.memory_space<vmem>>, vector<1x2x8x128xf32>
    %108 = vector.shape_cast %107 : vector<1x2x8x128xf32> to vector<2x8x128xf32>
    %109 = vector.shape_cast %105 : vector<2x8x128xf32> to vector<1x2x8x128xf32>
    tpu.vector_store %arg8[%106, %c0_57, %c0_58, %c0_59], %109 {strides = array<i32>} : memref<2x2x8x128xf32, #tpu.memory_space<vmem>>, vector<1x2x8x128xf32>,
    %110 = vector.shape_cast %96 : vector<16x128xf32> to vector<2x8x128xf32>
    %111 = arith.index_cast %9 : i32 to index
    %c0_60 = arith.constant 0 : index
    %c0_61 = arith.constant 0 : index
    %c0_62 = arith.constant 0 : index
    %112 = vector.load %arg9[%111, %c0_60, %c0_61, %c0_62] : memref<2x2x8x128xf32, #tpu.memory_space<vmem>>, vector<1x2x8x128xf32>
    %113 = vector.shape_cast %112 : vector<1x2x8x128xf32> to vector<2x8x128xf32>
    %114 = vector.shape_cast %110 : vector<2x8x128xf32> to vector<1x2x8x128xf32>
    tpu.vector_store %arg9[%111, %c0_60, %c0_61, %c0_62], %114 {strides = array<i32>} : memref<2x2x8x128xf32, #tpu.memory_space<vmem>>, vector<1x2x8x128xf32>,
    %c3 = arith.constant 3 : index
    %c0_63 = arith.constant 0 : index
    %c0_64 = arith.constant 0 : index
    %115 = vector.load %arg3[%c3, %c0_63, %c0_64] : memref<4x128x128xbf16, #tpu.memory_space<vmem>>, vector<1x128x128xbf16>
    %116 = vector.shape_cast %115 : vector<1x128x128xbf16> to vector<128x128xbf16>
    %cst_65 = arith.constant dense<0.000000e+00> : vector<16x128xf32>
    %117 = tpu.matmul %69, %116, %cst_65 {dimension_numbers = #tpu.dot_dimension_numbers<[1], [0], [0], [1], [0, 0, 1, 1], [], []>} : vector<16x128xbf16>, vector<128x128xbf16>, vector<16x128xf32> -> vector<16x128xf32>
    %118 = vector.shape_cast %117 : vector<16x128xf32> to vector<2x8x128xf32>
    %119 = arith.index_cast %9 : i32 to index
    %c0_66 = arith.constant 0 : index
    %c0_67 = arith.constant 0 : index
    %c0_68 = arith.constant 0 : index
    %120 = vector.load %arg10[%119, %c0_66, %c0_67, %c0_68] : memref<2x2x8x128xf32, #tpu.memory_space<vmem>>, vector<1x2x8x128xf32>
    %121 = vector.shape_cast %120 : vector<1x2x8x128xf32> to vector<2x8x128xf32>
    %122 = vector.shape_cast %118 : vector<2x8x128xf32> to vector<1x2x8x128xf32>
    tpu.vector_store %arg10[%119, %c0_66, %c0_67, %c0_68], %122 {strides = array<i32>} : memref<2x2x8x128xf32, #tpu.memory_space<vmem>>, vector<1x2x8x128xf32>,
    return
  }
  func.func @transform_0(%arg0: i32, %arg1: i32) -> (i32, i32, i32) {
    %c0_i32 = arith.constant 0 : i32
    %0 = arith.minsi %arg1, %c0_i32 : i32
    %c0_i32_0 = arith.constant 0 : i32
    %c0_i32_1 = arith.constant 0 : i32
    return %arg0, %0, %c0_i32_0 : i32, i32, i32
  }
  func.func @transform_1(%arg0: i32, %arg1: i32) -> (i32, i32, i32) {
    %c0_i32 = arith.constant 0 : i32
    %c0_i32_0 = arith.constant 0 : i32
    %c0_i32_1 = arith.constant 0 : i32
    %c0_i32_2 = arith.constant 0 : i32
    return %c0_i32, %c0_i32_0, %c0_i32_1 : i32, i32, i32
  }
  func.func @transform_2(%arg0: i32, %arg1: i32) -> (i32, i32, i32) {
    %c0_i32 = arith.constant 0 : i32
    %c0_i32_0 = arith.constant 0 : i32
    %c0_i32_1 = arith.constant 0 : i32
    %c0_i32_2 = arith.constant 0 : i32
    return %c0_i32, %c0_i32_0, %c0_i32_1 : i32, i32, i32
  }
  func.func @transform_3(%arg0: i32, %arg1: i32) -> (i32, i32, i32) {
    %c1_i32 = arith.constant 1 : i32
    %0 = arith.subi %arg1, %c1_i32 : i32
    %c0_i32 = arith.constant 0 : i32
    %1 = arith.maxsi %0, %c0_i32 : i32
    %c0_i32_0 = arith.constant 0 : i32
    %c0_i32_1 = arith.constant 0 : i32
    return %arg0, %1, %c0_i32_0 : i32, i32, i32
  }
}

</mosaic_0001>

<llo_original>
// kernel: tpu_custom_call.1
$region0: #{tpu_custom_call.1}
  #allocation0 [shape = 'u32[]', space=smem, size = 0x4, offset = 0x4, fixed_abs, tag = 'smem constant byte address 0x4 - core index']
  #allocation1 [shape = 'u32[144,128]{1,0:T(1,128)}', space=vmem, size = 0x12000, scoped, tag = 'internal scratch']
  %s0 = inlined_call_operand.hbm [shape: f32[2,16,128], index: 0, kind: input, shape index: {}]
  %s1 = inlined_call_operand.hbm [shape: f32[2,16,128], index: 1, kind: output, shape index: {}]
  %s2 = sld [smem:[#allocation0]]
  $region18: #{tpu_custom_call.1} parent=0
    _
  %s4 = ssub.s32 1, %s2
  %s5 = scalar_select 0, %s4, %s2
  $region1: #{tpu_custom_call.1} parent=0
    #allocation2 [shape = 'u8[16384]{0}', space=vmem, size = 0x4000, scoped, tag = 'input window, operand 0, single buffered']
    #allocation3 [shape = 's32[1]{0}', space=sflag, size = 0x4, scoped, tag = 'scoped memory for tpu_custom_call.1']
    #allocation4 [shape = 's32[1]{0}', space=sflag, size = 0x4, scoped, tag = 'scoped memory for tpu_custom_call.1']
    #allocation5 [shape = 'u8[16384]{0}', space=vmem, size = 0x4000, scoped, tag = 'output window, operand 0, single buffered']
    %6 = vsyncpa [#allocation3], 0
    %7 = vsyncpa [#allocation4], 0
    // Predicated region
    $region2: #{tpu_custom_call.1} parent=1 // pred_check
      _
    $region3: #{tpu_custom_call.1} parent=1 // pred_check_branch
      %9 = sbr.rel (0) target = $region5
    $region4: #{tpu_custom_call.1} parent=1 // pred_region
      %s11 = ssub.s32 512, 512
      %12 = vsyncadd [#allocation3], %s11
      %s13 = sshll.u32 [#allocation2], 4
      %s14 = int_to_ptr.vmem [resolvable:$true] %s13
      %19 = dma.hbm_to_vmem [thread:$0]  %s0, 512, %s14, [#allocation3], 128, 128, 8
    $region5: #{tpu_custom_call.1} parent=1 // pred_fallthru
      _
    // Predicated region
    $region6: #{tpu_custom_call.1} parent=1 // pred_check
      _
    $region7: #{tpu_custom_call.1} parent=1 // pred_check_branch
      %21 = sbr.rel (0) target = $region9
    $region8: #{tpu_custom_call.1} parent=1 // pred_region
      %22 = dma.done [#allocation3], 512
    $region9: #{tpu_custom_call.1} parent=1 // pred_fallthru
      _
    %v23 = vld [vmem:[#allocation2] sm:$0xff]
    %v24 = vld [vmem:[#allocation2 + $0x8] sm:$0xff]
    %v25 = vld [vmem:[#allocation2 + $0x10] sm:$0xff]
    %v26 = vld [vmem:[#allocation2 + $0x18] sm:$0xff]
    %v27 = vrot.slane %v23, 7
    %v28 = vrot.slane %v25, 7
    %v29 = vrot.slane %v24, 7
    %v30 = vrot.slane %v26, 7
    %v31 = vlaneseq
    %v32 = vshrl.u32 %v31, 7
    %vm33 = vcmp.lt.s32.totalorder %v32, 1
    %v34 = vsel %vm33, %v27, %v29
    %v35 = vsel %vm33, %v28, %v30
    %v36 = vsel %vm33, %v29, %v27
    %v37 = vsel %vm33, %v30, %v28
    %38 = vst [vmem:[#allocation5] sm:$0xff] %v36
    %39 = vst [vmem:[#allocation5 + $0x8] sm:$0xff] %v34
    %40 = vst [vmem:[#allocation5 + $0x10] sm:$0xff] %v37
    %41 = vst [vmem:[#allocation5 + $0x18] sm:$0xff] %v35
    // Predicated region
    $region10: #{tpu_custom_call.1} parent=1 // pred_check
      _
    $region11: #{tpu_custom_call.1} parent=1 // pred_check_branch
      %43 = sbr.rel (0) target = $region13
    $region12: #{tpu_custom_call.1} parent=1 // pred_region
      %s45 = ssub.s32 512, 512
      %46 = vsyncadd [#allocation4], %s45
      %s47 = sshll.u32 [#allocation5], 4
      %s48 = int_to_ptr.vmem [resolvable:$true] %s47
      %53 = dma.vmem_to_hbm [thread:$0]  %s48, 512, %s1, [#allocation4], 128, 128, 8
    $region13: #{tpu_custom_call.1} parent=1 // pred_fallthru
      _
    // Predicated region
    $region14: #{tpu_custom_call.1} parent=1 // pred_check
      _
    $region15: #{tpu_custom_call.1} parent=1 // pred_check_branch
      %55 = sbr.rel (0) target = $region17
    $region16: #{tpu_custom_call.1} parent=1 // pred_region
      %56 = dma.done [#allocation4], 512
    $region17: #{tpu_custom_call.1} parent=1 // pred_fallthru
      _
    %57 = vsyncpa [#allocation3], 1
    %58 = vsyncpa [#allocation4], 1

// kernel: tpu_custom_call.1
$region0: #{tpu_custom_call.1}
  #allocation0 [shape = 'u32[]', space=smem, size = 0x4, offset = 0x4, fixed_abs, tag = 'smem constant byte address 0x4 - core index']
  #allocation1 [shape = 'u32[144,128]{1,0:T(1,128)}', space=vmem, size = 0x12000, scoped, tag = 'internal scratch']
  #allocation2 [shape = 'f32[2,1,128]{2,1,0:T(1,128)}', space=vmem, size = 0x400, scoped, tag = 'scratch operand']
  #allocation3 [shape = 'f32[2,2,8,128]{3,2,1,0:T(8,128)}', space=vmem, size = 0x4000, scoped, tag = 'scratch operand']
  #allocation4 [shape = 'f32[2,2,8,128]{3,2,1,0:T(8,128)}', space=vmem, size = 0x4000, scoped, tag = 'scratch operand']
  #allocation5 [shape = 'f32[2,2,8,128]{3,2,1,0:T(8,128)}', space=vmem, size = 0x4000, scoped, tag = 'scratch operand']
  #allocation6 [shape = 'f32[2,2,8,128]{3,2,1,0:T(8,128)}', space=vmem, size = 0x4000, scoped, tag = 'scratch operand']
  %s0 = inlined_call_operand.hbm [shape: f32[2,8,128], index: 0, kind: input, shape index: {}]
  %s1 = inlined_call_operand.hbm [shape: bf16[4,128,128], index: 1, kind: input, shape index: {}]
  %s2 = inlined_call_operand.vmem [shape: f32[2,1,128], index: 2, kind: input, shape index: {}]
  %s3 = inlined_call_operand.hbm [shape: bf16[2,8,128], index: 3, kind: output, shape index: {}]
  %s4 = sld [smem:[#allocation0]]
  $region53: #{tpu_custom_call.1} parent=0
    _
  %s6 = ssub.s32 1, %s4
  %s7 = scalar_select 0, %s6, %s4
  $region1: #{tpu_custom_call.1} parent=0
    #allocation7 [shape = 'u8[16384]{0}', space=vmem, size = 0x4000, scoped, tag = 'input window, operand 0']
    #allocation8 [shape = 's32[2]{0}', space=sflag, size = 0x8, scoped, tag = 'scoped memory for tpu_custom_call.1']
    #allocation9 [shape = 's32[2]{0}', space=sflag, size = 0x8, scoped, tag = 'scoped memory for tpu_custom_call.1']
    #allocation10 [shape = 'u8[131072]{0}', space=vmem, size = 0x20000, scoped, tag = 'input window, operand 1, single buffered']
    #allocation11 [shape = 's32[1]{0}', space=sflag, size = 0x4, scoped, tag = 'scoped memory for tpu_custom_call.1']
    #allocation12 [shape = 'u8[8192]{0}', space=vmem, size = 0x2000, scoped, tag = 'output window, operand 0']
    %8 = vsyncpa [#allocation8], 0
    %s9 = scalar_lea.sflag [#allocation8], 1
    %10 = vsyncpa %s9, 0
    %11 = vsyncpa [#allocation11], 0
    %12 = vsyncpa [#allocation9], 0
    %s13 = scalar_lea.sflag [#allocation9], 1
    %14 = vsyncpa %s13, 0
    loop: start=0, step=1, limit=4
    $region2: #{tpu_custom_call.1} parent=1 // loop_pre_header
      _
    $region3: #{tpu_custom_call.1} parent=1 // loop_header
      %s16 = sphi 0, %s20
      %p17 = scmp.ge.s32.totalorder %s16, 4
      %s23 = sphi 0, %s35
      %s24 = sphi 0, %s31
      %s25 = sphi 0, %s23
      %s26 = sphi 0, %s24
      %s27 = sphi 0, %s25
      %s28 = sphi 0, %s26
      %s44 = sphi 0, %s46
      %s47 = sphi 0, %s44
      %s48 = sphi 0, %s47
      %s64 = sphi 0, %s48
      %s68 = sphi 0, %s68
      %s70 = sphi 0, %s68
      %s71 = sphi 0, %s70
      %s85 = sphi 0, %s71
      %s89 = sphi 0, %s89
      %s91 = sphi 0, %s89
      %s92 = sphi 0, %s91
      %s106 = sphi 0, %s92
      %s120 = sphi 0, %s122
      %s123 = sphi 0, %s120
      %s124 = sphi 0, %s123
      %s140 = sphi 0, %s124
    $region4: #{tpu_custom_call.1} parent=1 // loop_header_branch
      %19 = sbr.rel (%p17) target = $region8
    $region5: #{tpu_custom_call.1} parent=1 // loop_body
      %s21 = ssub.s32 %s16, 1
      %s22 = ssub.s32 %s16, 2
      %s29 = sadd.s32 1, %s24
      %p30 = scmp.ge.s32.totalorder %s29, 2
      %s31 = scalar_select %p30, 0, %s29
      %s32 = sadd.s32 1, %s23
      %s33 = scalar_select %p30, %s32, %s23
      %p34 = scmp.ge.s32.totalorder %s33, 1
      %s35 = scalar_select %p34, 0, %s33
      %p36 = scmp.lt.s32.totalorder %s24, 0
      %s37 = scalar_select %p36, %s24, 0
      %p38 = scmp.lt.s32.totalorder %s31, 0
      %s39 = scalar_select %p38, %s31, 0
      %s40 = ssub.s32 %s23, %s35
      %s41 = ssub.s32 %s37, %s39
      %s42 = sor.u32 %s40, %s41
      %p43 = scmp.eq.s32.totalorder %s42, 0
      %s45 = sadd.s32 %s44, 1
      %s46 = scalar_select %p43, %s44, %s45
      %p49 = pneg %p43
      %p50 = scmp.eq.s32.totalorder %s16, 1
      %p51 = por %p49, %p50
      %p52 = scmp.ne.s32.totalorder %s44, %s47
      %p53 = scmp.eq.s32.totalorder %s16, 0
      %p54 = por %p52, %p53
      %p55 = scmp.ne.s32.totalorder %s44, %s47
      %p56 = scmp.eq.s32.totalorder %s21, 1
      %p57 = por %p55, %p56
      %p58 = scmp.ne.s32.totalorder %s47, %s48
      %p59 = scmp.eq.s32.totalorder %s21, 0
      %p60 = por %p58, %p59
      %p61 = scmp.ne.s32.totalorder %s47, %s48
      %p62 = scmp.eq.s32.totalorder %s22, 1
      %p63 = por %p61, %p62
      %p65 = scmp.ne.s32.totalorder %s48, %s64
      %p66 = scmp.eq.s32.totalorder %s22, 0
      %p67 = por %p65, %p66
      %s69 = sadd.s32 %s68, 1
      %p72 = scmp.eq.s32.totalorder %s16, 1
      %p73 = scmp.ne.s32.totalorder %s68, %s70
      %p74 = scmp.eq.s32.totalorder %s16, 0
      %p75 = por %p73, %p74
      %p76 = scmp.ne.s32.totalorder %s68, %s70
      %p77 = scmp.eq.s32.totalorder %s21, 1
      %p78 = por %p76, %p77
      %p79 = scmp.ne.s32.totalorder %s70, %s71
      %p80 = scmp.eq.s32.totalorder %s21, 0
      %p81 = por %p79, %p80
      %p82 = scmp.ne.s32.totalorder %s70, %s71
      %p83 = scmp.eq.s32.totalorder %s22, 1
      %p84 = por %p82, %p83
      %p86 = scmp.ne.s32.totalorder %s71, %s85
      %p87 = scmp.eq.s32.totalorder %s22, 0
      %p88 = por %p86, %p87
      %s90 = sadd.s32 %s89, 1
      %p93 = scmp.eq.s32.totalorder %s16, 1
      %p94 = scmp.ne.s32.totalorder %s89, %s91
      %p95 = scmp.eq.s32.totalorder %s16, 0
      %p96 = por %p94, %p95
      %p97 = scmp.ne.s32.totalorder %s89, %s91
      %p98 = scmp.eq.s32.totalorder %s21, 1
      %p99 = por %p97, %p98
      %p100 = scmp.ne.s32.totalorder %s91, %s92
      %p101 = scmp.eq.s32.totalorder %s21, 0
      %p102 = por %p100, %p101
      %p103 = scmp.ne.s32.totalorder %s91, %s92
      %p104 = scmp.eq.s32.totalorder %s22, 1
      %p105 = por %p103, %p104
      %p107 = scmp.ne.s32.totalorder %s92, %s106
      %p108 = scmp.eq.s32.totalorder %s22, 0
      %p109 = por %p107, %p108
      %s110 = ssub.s32 %s24, 1
      %p111 = scmp.gt.s32.totalorder %s110, 0
      %s112 = scalar_select %p111, %s110, 0
      %s113 = ssub.s32 %s31, 1
      %p114 = scmp.gt.s32.totalorder %s113, 0
      %s115 = scalar_select %p114, %s113, 0
      %s116 = ssub.s32 %s23, %s35
      %s117 = ssub.s32 %s112, %s115
      %s118 = sor.u32 %s116, %s117
      %p119 = scmp.eq.s32.totalorder %s118, 0
      %s121 = sadd.s32 %s120, 1
      %s122 = scalar_select %p119, %s120, %s121
      %p125 = pneg %p119
      %p126 = scmp.eq.s32.totalorder %s16, 1
      %p127 = por %p125, %p126
      %p128 = scmp.ne.s32.totalorder %s120, %s123
      %p129 = scmp.eq.s32.totalorder %s16, 0
      %p130 = por %p128, %p129
      %p131 = scmp.ne.s32.totalorder %s120, %s123
      %p132 = scmp.eq.s32.totalorder %s21, 1
      %p133 = por %p131, %p132
      %p134 = scmp.ne.s32.totalorder %s123, %s124
      %p135 = scmp.eq.s32.totalorder %s21, 0
      %p136 = por %p134, %p135
      %p137 = scmp.ne.s32.totalorder %s123, %s124
      %p138 = scmp.eq.s32.totalorder %s22, 1
      %p139 = por %p137, %p138
      %p141 = scmp.ne.s32.totalorder %s124, %s140
      %p142 = scmp.eq.s32.totalorder %s22, 0
      %p143 = por %p141, %p142
      %p144 = scmp.le.s32.totalorder 1, %s16
      %p145 = scmp.lt.s32.totalorder %s16, 3
      %p146 = pnand %p144, %p145
      %p147 = pneg %p146
      // Predicated region
      $region9: #{tpu_custom_call.1} parent=5 // pred_check
        _
      $region10: #{tpu_custom_call.1} parent=5 // pred_check_branch
        %149 = sbr.rel (%p146) target = $region12
      $region11: #{tpu_custom_call.1} parent=5 // pred_region
        %s150 = ssub.s32 %s16, 1
        // Predicated region
        $region13: #{tpu_custom_call.1} parent=11 // pred_check
          %p151 = pneg %p81
        $region14: #{tpu_custom_call.1} parent=11 // pred_check_branch
          %153 = sbr.rel (%p151) target = $region16
        $region15: #{tpu_custom_call.1} parent=11 // pred_region
          %s155 = ssub.s32 4096, 4096
          %156 = vsyncadd [#allocation11], %s155
          %s157 = sshll.u32 [#allocation10], 4
          %s158 = int_to_ptr.vmem [resolvable:$true] %s157
          %163 = dma.hbm_to_vmem [thread:$0]  %s1, 4096, %s158, [#allocation11], 64, 64, 4
        $region16: #{tpu_custom_call.1} parent=11 // pred_fallthru
          _
        // Predicated region
        $region17: #{tpu_custom_call.1} parent=11 // pred_check
          %p164 = pneg %p102
        $region18: #{tpu_custom_call.1} parent=11 // pred_check_branch
          %166 = sbr.rel (%p164) target = $region20
        $region19: #{tpu_custom_call.1} parent=11 // pred_region
          _
        $region20: #{tpu_custom_call.1} parent=11 // pred_fallthru
          _
      $region12: #{tpu_custom_call.1} parent=5 // pred_fallthru
        _
      %p167 = scmp.lt.s32.totalorder %s16, 2
      // Predicated region
      $region21: #{tpu_custom_call.1} parent=5 // pred_check
        %p168 = pneg %p167
      $region22: #{tpu_custom_call.1} parent=5 // pred_check_branch
        %170 = sbr.rel (%p168) target = $region24
      $region23: #{tpu_custom_call.1} parent=5 // pred_region
        // Predicated region
        $region25: #{tpu_custom_call.1} parent=23 // pred_check
          %p171 = pneg %p54
        $region26: #{tpu_custom_call.1} parent=23 // pred_check_branch
          %173 = sbr.rel (%p171) target = $region28
        $region27: #{tpu_custom_call.1} parent=23 // pred_region
          %s174 = sand.u32 %s44, 1
          %s175 = scalar_lea.sflag [#allocation8], %s174
          %s176 = sand.u32 %s44, 1
          %s177 = smul.addr %s176, 16
          %s178 = scalar_lea.vmem [#allocation7], %s177
          %p179 = scmp.lt.s32.totalorder %s24, 0
          %s180 = scalar_select %p179, %s24, 0
          %s181 = smul.u32 2, %s23
          %s183 = ssub.s32 256, 256
          %184 = vsyncadd %s175, %s183
          %s185 = sadd.s32 %s180, %s181
          %s186 = smul.addr %s185, 128
          %s187 = scalar_lea.hbm %s0, %s186
          %s188 = sshll.u32 %s178, 4
          %s189 = int_to_ptr.vmem [resolvable:$true] %s188
          %194 = dma.hbm_to_vmem [thread:$0]  %s187, 256, %s189, %s175, 128, 128, 8
        $region28: #{tpu_custom_call.1} parent=23 // pred_fallthru
          _
      $region24: #{tpu_custom_call.1} parent=5 // pred_fallthru
        _
      %p195 = scmp.le.s32.totalorder 1, %s16
      %p196 = scmp.lt.s32.totalorder %s16, 3
      %p197 = pnand %p195, %p196
      %p198 = pneg %p197
      // Predicated region
      $region29: #{tpu_custom_call.1} parent=5 // pred_check
        _
      $region30: #{tpu_custom_call.1} parent=5 // pred_check_branch
        %200 = sbr.rel (%p197) target = $region32
      $region31: #{tpu_custom_call.1} parent=5 // pred_region
        %s201 = ssub.s32 %s16, 1
        %s202 = sand.u32 %s47, 1
        %s203 = scalar_lea.sflag [#allocation8], %s202
        %s204 = sand.u32 %s47, 1
        %s205 = smul.addr %s204, 16
        %s206 = scalar_lea.vmem [#allocation7], %s205
        // Predicated region
        $region33: #{tpu_custom_call.1} parent=31 // pred_check
          %p207 = pneg %p60
        $region34: #{tpu_custom_call.1} parent=31 // pred_check_branch
          %209 = sbr.rel (%p207) target = $region36
        $region35: #{tpu_custom_call.1} parent=31 // pred_region
          %210 = dma.done %s203, 256
        $region36: #{tpu_custom_call.1} parent=31 // pred_fallthru
          _
        // Predicated region
        $region37: #{tpu_custom_call.1} parent=31 // pred_check
          %p211 = pneg %p81
        $region38: #{tpu_custom_call.1} parent=31 // pred_check_branch
          %213 = sbr.rel (%p211) target = $region40
        $region39: #{tpu_custom_call.1} parent=31 // pred_region
          %214 = dma.done [#allocation11], 4096
        $region40: #{tpu_custom_call.1} parent=31 // pred_fallthru
          _
        %s215 = sand.u32 %s47, 1
        %s216 = scalar_lea.sflag [#allocation8], %s215
        %s217 = sand.u32 %s47, 1
        %s218 = smul.addr %s217, 16
        %s219 = scalar_lea.vmem [#allocation7], %s218
        %p220 = pneg %p60
        %p221 = pneg %p57
        %p222 = pneg %p81
        %p223 = pneg %p78
        %p224 = pneg %p102
        %p225 = pneg %p99
        %p226 = pneg %p136
        %p227 = pneg %p133
        %s228 = sand.u32 %s123, 1
        %s229 = scalar_lea.sflag [#allocation9], %s228
        %s230 = sand.u32 %s123, 1
        %s231 = smul.addr %s230, 8
        %s232 = scalar_lea.vmem [#allocation12], %s231
        %p233 = scmp.lt.s32.totalorder %s26, 0
        %s234 = scalar_select %p233, %s26, 0
        %s235 = smul.u32 2, %s25
        %s236 = ssub.s32 %s26, 1
        %p237 = scmp.gt.s32.totalorder %s236, 0
        %s238 = scalar_select %p237, %s236, 0
        %s239 = smul.u32 2, %s25
        %p241 = scmp.lt.s32.totalorder %s26, 0
        %s242 = ssub.s32 0, %s26
        %s243 = scalar_select %p241, %s242, %s26
        %s244 = sand.u32 %s243, 1
        %s245 = ssub.s32 0, %s244
        %s246 = scalar_select %p241, %s245, %s244
        %p247 = scmp.ne.s32.totalorder %s246, 0
        %p248 = scmp.lt.s32.totalorder %s246, 0
        %p249 = pnand %p248, %p247
        %p250 = pneg %p249
        %s251 = sadd.s32 %s246, 2
        %s252 = scalar_select %p250, %s251, %s246
        %s253 = ssub.s32 1, %s252
        %s254 = smul.u32 %s253, 16
        %s255 = scalar_lea.vmem [#allocation3], %s254
        %v256 = vld [vmem:[%s255] sm:$0xff]
        %v257 = vld [vmem:[%s255 + $0x8] sm:$0xff]
        %s258 = scalar_lea.vmem [#allocation4], %s254
        %v259 = vld [vmem:[%s258] sm:$0xff]
        %v260 = vld [vmem:[%s258 + $0x8] sm:$0xff]
        %v263 = vrot.slane %v259, 7
        %v264 = vrot.slane %v260, 7
        %vm267 = vcmask 1040384
        %v268 = vsel %vm267, 0.0, %v263
        %v269 = vsel %vm267, 0.0, %v264
        %v272 = vrot.slane %v256, 7
        %v273 = vrot.slane %v257, 7
        %v276 = vsel %vm267, 1.0, %v272
        %v277 = vsel %vm267, 1.0, %v273
        %v278 = vmul.f32 %v256, %v268
        %v279 = vmul.f32 %v257, %v269
        %v280 = vadd.f32 %v259, %v278
        %v281 = vadd.f32 %v260, %v279
        %v282 = vmul.f32 %v256, %v276
        %v283 = vmul.f32 %v257, %v277
        %v286 = vrot.slane %v280, 6
        %v287 = vrot.slane %v281, 6
        %vm290 = vcmask 1041408
        %v291 = vsel %vm290, 0.0, %v286
        %v292 = vsel %vm290, 0.0, %v287
        %v295 = vrot.slane %v282, 6
        %v296 = vrot.slane %v283, 6
        %v299 = vsel %vm290, 1.0, %v295
        %v300 = vsel %vm290, 1.0, %v296
        %v301 = vmul.f32 %v282, %v291
        %v302 = vmul.f32 %v283, %v292
        %v303 = vadd.f32 %v280, %v301
        %v304 = vadd.f32 %v281, %v302
        %v305 = vmul.f32 %v282, %v299
        %v306 = vmul.f32 %v283, %v300
        %v309 = vrot.slane %v303, 4
        %v310 = vrot.slane %v304, 4
        %vm313 = vcmask 1043456
        %v314 = vsel %vm313, 0.0, %v309
        %v315 = vsel %vm313, 0.0, %v310
        %v318 = vrot.slane %v305, 4
        %v319 = vrot.slane %v306, 4
        %v322 = vsel %vm313, 1.0, %v318
        %v323 = vsel %vm313, 1.0, %v319
        %v324 = vmul.f32 %v305, %v314
        %v325 = vmul.f32 %v306, %v315
        %v326 = vadd.f32 %v303, %v324
        %v327 = vadd.f32 %v304, %v325
        %v328 = vmul.f32 %v305, %v322
        %v329 = vmul.f32 %v306, %v323
        %p330 = scmp.gt.s32.totalorder %s26, 1
        %v331 = vld [vmem:[#allocation2] sm:$0x1]
        %v332 = vld [vmem:[#allocation2 + $0x1] sm:$0x1]
        %s333 = scalar_select %p330, 1, 0
        %v334 = vstv %s333
        %vm335 = vcmp.eq.s32.totalorder %v334, 1
        %v336 = vsel %vm335, %v331, 0.0
        %v337 = vsel %vm335, %v332, 0.0
        %v340 = vlaneseq
        %v341 = vshrl.u32 %v340, 7
        %v342 = vsub.s32 0, %v341
        %v343 = vrot.slane %v336, %v342
        %v344 = vlaneseq
        %v345 = vshrl.u32 %v344, 7
        %v346 = vsub.s32 0, %v345
        %v347 = vrot.slane %v337, %v346
        %v350 = vmul.f32 %v328, %v343
        %v351 = vmul.f32 %v329, %v347
        %v352 = vadd.f32 %v350, %v326
        %v353 = vadd.f32 %v351, %v327
        %354 = vst [vmem:[#allocation2 - $0x7] sm:$0x80] %v352
        %355 = vst [vmem:[#allocation2 - $0x6] sm:$0x80] %v353
        %s356 = scalar_lea.vmem [#allocation5], %s254
        %v357 = vld [vmem:[%s356] sm:$0xff]
        %v358 = vld [vmem:[%s356 + $0x8] sm:$0xff]
        %s359 = scalar_lea.vmem [#allocation6], %s254
        %v360 = vld [vmem:[%s359] sm:$0xff]
        %v361 = vld [vmem:[%s359 + $0x8] sm:$0xff]
        %v362 = vtanh.pop %v352
        %v363 = vtanh.pop %v353
        %v364 = vmul.f32 %v357, %v362
        %v365 = vmul.f32 %v358, %v363
        %v366 = vsub.f32 1.0, %v357
        %v367 = vsub.f32 1.0, %v358
        %v368 = vmul.f32 %v366, %v360
        %v369 = vmul.f32 %v367, %v361
        %v370 = vadd.f32 %v364, %v368
        %v371 = vadd.f32 %v365, %v369
        %v372 = vpack.c.bf16 %v370, %v370
        %v373 = vpack.c.bf16 %v371, %v371
        %374 = vst [vmem:[%s232] sm:$0xf] %v372
        %375 = vst [vmem:[%s232 + $0x4] sm:$0xf] %v373
        %v376 = vld [vmem:[%s206] sm:$0xff]
        %v377 = vld [vmem:[%s206 + $0x8] sm:$0xff]
        %v378 = vpack.c.bf16 %v377, %v376
        %v379 = vld [vmem:[#allocation10] sm:$0xf]
        %v380 = vld [vmem:[#allocation10 + $0x4] sm:$0xf]
        %v381 = vld [vmem:[#allocation10 + $0x8] sm:$0xf]
        %v382 = vld [vmem:[#allocation10 + $0xc] sm:$0xf]
        %v383 = vld [vmem:[#allocation10 + $0x10] sm:$0xf]
        %v384 = vld [vmem:[#allocation10 + $0x14] sm:$0xf]
        %v385 = vld [vmem:[#allocation10 + $0x18] sm:$0xf]
        %v386 = vld [vmem:[#allocation10 + $0x1c] sm:$0xf]
        %v387 = vld [vmem:[#allocation10 + $0x20] sm:$0xf]
        %v388 = vld [vmem:[#allocation10 + $0x24] sm:$0xf]
        %v389 = vld [vmem:[#allocation10 + $0x28] sm:$0xf]
        %v390 = vld [vmem:[#allocation10 + $0x2c] sm:$0xf]
        %v391 = vld [vmem:[#allocation10 + $0x30] sm:$0xf]
        %v392 = vld [vmem:[#allocation10 + $0x34] sm:$0xf]
        %v393 = vld [vmem:[#allocation10 + $0x38] sm:$0xf]
        %v394 = vld [vmem:[#allocation10 + $0x3c] sm:$0xf]
        %v411 = vunpack.c.l.b16 %v379
        %v412 = vunpack.c.l.b16 %v380
        %v413 = vunpack.c.l.b16 %v381
        %v414 = vunpack.c.l.b16 %v382
        %v415 = vunpack.c.l.b16 %v383
        %v416 = vunpack.c.l.b16 %v384
        %v417 = vunpack.c.l.b16 %v385
        %v418 = vunpack.c.l.b16 %v386
        %v419 = vunpack.c.l.b16 %v387
        %v420 = vunpack.c.l.b16 %v388
        %v421 = vunpack.c.l.b16 %v389
        %v422 = vunpack.c.l.b16 %v390
        %v423 = vunpack.c.l.b16 %v391
        %v424 = vunpack.c.l.b16 %v392
        %v425 = vunpack.c.l.b16 %v393
        %v426 = vunpack.c.l.b16 %v394
        %v427 = vpack.c.b16 %v412, %v411
        %v428 = vpack.c.b16 %v414, %v413
        %v429 = vpack.c.b16 %v416, %v415
        %v430 = vpack.c.b16 %v418, %v417
        %v431 = vpack.c.b16 %v420, %v419
        %v432 = vpack.c.b16 %v422, %v421
        %v433 = vpack.c.b16 %v424, %v423
        %v434 = vpack.c.b16 %v426, %v425
        %443 = vmatprep.subr.bf16.mxu0 0
        %444 = vmatpush1.bf16.msra.mxu0 %v434
        %445 = vmatprep.subr.bf16.mxu0 0
        %446 = vmatpush1.bf16.msra.mxu0 %v433
        %447 = vmatprep.subr.bf16.mxu0 0
        %448 = vmatpush1.bf16.msra.mxu0 %v432
        %449 = vmatprep.subr.bf16.mxu0 0
        %450 = vmatpush1.bf16.msra.mxu0 %v431
        %451 = vmatprep.subr.bf16.mxu0 0
        %452 = vmatpush1.bf16.msra.mxu0 %v430
        %453 = vmatprep.subr.bf16.mxu0 0
        %454 = vmatpush1.bf16.msra.mxu0 %v429
        %455 = vmatprep.subr.bf16.mxu0 0
        %456 = vmatpush1.bf16.msra.mxu0 %v428
        %457 = vmatprep.subr.bf16.mxu0 0
        %458 = vmatpush1.bf16.msra.mxu0 %v427
        %459 = vmatprep.subr.bf16.mxu0 0
        %460 = vmatpush2.bf16.msra.mxu0 0
        %461 = vmatprep.subr.bf16.mxu0 0
        %462 = vmatpush2.bf16.msra.mxu0 0
        %463 = vmatprep.subr.bf16.mxu0 0
        %464 = vmatpush2.bf16.msra.mxu0 0
        %465 = vmatprep.subr.bf16.mxu0 0
        %466 = vmatpush2.bf16.msra.mxu0 0
        %467 = vmatprep.subr.bf16.mxu0 0
        %468 = vmatpush2.bf16.msra.mxu0 0
        %469 = vmatprep.subr.bf16.mxu0 0
        %470 = vmatpush2.bf16.msra.mxu0 0
        %471 = vmatprep.subr.bf16.mxu0 0
        %472 = vmatpush2.bf16.msra.mxu0 0
        %473 = vmatprep.subr.bf16.mxu0 0
        %474 = vmatpush2.bf16.msra.mxu0 0
        %475 = vmatprep.mubr.bf16.mxu0 0
        %476 = vmatmul.mubr.bf16.gmra.mxu0 %v378
        %v477 = vpop.f32.mrf.mxu0
        %v478 = vadd.f32 0.0, %v477
        %v479 = vpop.f32.mrf.mxu0
        %v480 = vpop.f32.mrf.mxu0
        %v481 = vadd.f32 0.0, %v480
        %v482 = vpop.f32.mrf.mxu0
        %483 = vdwg.mxu0
        %s484 = scalar_lea.vmem [#allocation10], 64
        %v485 = vld [vmem:[%s484] sm:$0xf]
        %v486 = vld [vmem:[%s484 + $0x4] sm:$0xf]
        %v487 = vld [vmem:[%s484 + $0x8] sm:$0xf]
        %v488 = vld [vmem:[%s484 + $0xc] sm:$0xf]
        %v489 = vld [vmem:[%s484 + $0x10] sm:$0xf]
        %v490 = vld [vmem:[%s484 + $0x14] sm:$0xf]
        %v491 = vld [vmem:[%s484 + $0x18] sm:$0xf]
        %v492 = vld [vmem:[%s484 + $0x1c] sm:$0xf]
        %v493 = vld [vmem:[%s484 + $0x20] sm:$0xf]
        %v494 = vld [vmem:[%s484 + $0x24] sm:$0xf]
        %v495 = vld [vmem:[%s484 + $0x28] sm:$0xf]
        %v496 = vld [vmem:[%s484 + $0x2c] sm:$0xf]
        %v497 = vld [vmem:[%s484 + $0x30] sm:$0xf]
        %v498 = vld [vmem:[%s484 + $0x34] sm:$0xf]
        %v499 = vld [vmem:[%s484 + $0x38] sm:$0xf]
        %v500 = vld [vmem:[%s484 + $0x3c] sm:$0xf]
        %v501 = vld [vmem:[%s2] sm:$0x1]
        %v503 = vlaneseq
        %v504 = vshrl.u32 %v503, 7
        %v505 = vsub.s32 0, %v504
        %v506 = vrot.slane %v501, %v505
        %v524 = vunpack.c.l.b16 %v485
        %v525 = vunpack.c.l.b16 %v486
        %v526 = vunpack.c.l.b16 %v487
        %v527 = vunpack.c.l.b16 %v488
        %v528 = vunpack.c.l.b16 %v489
        %v529 = vunpack.c.l.b16 %v490
        %v530 = vunpack.c.l.b16 %v491
        %v531 = vunpack.c.l.b16 %v492
        %v532 = vunpack.c.l.b16 %v493
        %v533 = vunpack.c.l.b16 %v494
        %v534 = vunpack.c.l.b16 %v495
        %v535 = vunpack.c.l.b16 %v496
        %v536 = vunpack.c.l.b16 %v497
        %v537 = vunpack.c.l.b16 %v498
        %v538 = vunpack.c.l.b16 %v499
        %v539 = vunpack.c.l.b16 %v500
        %v540 = vpack.c.b16 %v525, %v524
        %v541 = vpack.c.b16 %v527, %v526
        %v542 = vpack.c.b16 %v529, %v528
        %v543 = vpack.c.b16 %v531, %v530
        %v544 = vpack.c.b16 %v533, %v532
        %v545 = vpack.c.b16 %v535, %v534
        %v546 = vpack.c.b16 %v537, %v536
        %v547 = vpack.c.b16 %v539, %v538
        %556 = vmatprep.subr.bf16.mxu0 0
        %557 = vmatpush1.bf16.msra.mxu0 %v547
        %558 = vmatprep.subr.bf16.mxu0 0
        %559 = vmatpush1.bf16.msra.mxu0 %v546
        %560 = vmatprep.subr.bf16.mxu0 0
        %561 = vmatpush1.bf16.msra.mxu0 %v545
        %562 = vmatprep.subr.bf16.mxu0 0
        %563 = vmatpush1.bf16.msra.mxu0 %v544
        %564 = vmatprep.subr.bf16.mxu0 0
        %565 = vmatpush1.bf16.msra.mxu0 %v543
        %566 = vmatprep.subr.bf16.mxu0 0
        %567 = vmatpush1.bf16.msra.mxu0 %v542
        %568 = vmatprep.subr.bf16.mxu0 0
        %569 = vmatpush1.bf16.msra.mxu0 %v541
        %570 = vmatprep.subr.bf16.mxu0 0
        %571 = vmatpush1.bf16.msra.mxu0 %v540
        %572 = vmatprep.subr.bf16.mxu0 0
        %573 = vmatpush2.bf16.msra.mxu0 0
        %574 = vmatprep.subr.bf16.mxu0 0
        %575 = vmatpush2.bf16.msra.mxu0 0
        %576 = vmatprep.subr.bf16.mxu0 0
        %577 = vmatpush2.bf16.msra.mxu0 0
        %578 = vmatprep.subr.bf16.mxu0 0
        %579 = vmatpush2.bf16.msra.mxu0 0
        %580 = vmatprep.subr.bf16.mxu0 0
        %581 = vmatpush2.bf16.msra.mxu0 0
        %582 = vmatprep.subr.bf16.mxu0 0
        %583 = vmatpush2.bf16.msra.mxu0 0
        %584 = vmatprep.subr.bf16.mxu0 0
        %585 = vmatpush2.bf16.msra.mxu0 0
        %586 = vmatprep.subr.bf16.mxu0 0
        %587 = vmatpush2.bf16.msra.mxu0 0
        %588 = vmatprep.mubr.bf16.mxu0 0
        %589 = vmatmul.mubr.bf16.gmra.mxu0 %v378
        %v590 = vpop.f32.mrf.mxu0
        %v591 = vadd.f32 %v506, %v590
        %v592 = vpop.f32.mrf.mxu0
        %v593 = vpop.f32.mrf.mxu0
        %v594 = vadd.f32 %v506, %v593
        %v595 = vpop.f32.mrf.mxu0
        %596 = vdwg.mxu0
        %v597 = vxor.u32 %v591, 2147483648
        %v598 = vxor.u32 %v594, 2147483648
        %v599 = vmul.f32 %v597, 1.442695
        %v600 = vpow.pop %v599
        %v601 = vmul.f32 %v598, 1.442695
        %v602 = vpow.pop %v601
        %v603 = vadd.f32 %v600, 1.0
        %v604 = vadd.f32 %v602, 1.0
        %v605 = vrcp.pop %v603
        %v606 = vmul.f32 1.0, %v605
        %v607 = vrcp.pop %v604
        %v608 = vmul.f32 1.0, %v607
        %s609 = scalar_lea.vmem [#allocation10], 128
        %v610 = vld [vmem:[%s609] sm:$0xf]
        %v611 = vld [vmem:[%s609 + $0x4] sm:$0xf]
        %v612 = vld [vmem:[%s609 + $0x8] sm:$0xf]
        %v613 = vld [vmem:[%s609 + $0xc] sm:$0xf]
        %v614 = vld [vmem:[%s609 + $0x10] sm:$0xf]
        %v615 = vld [vmem:[%s609 + $0x14] sm:$0xf]
        %v616 = vld [vmem:[%s609 + $0x18] sm:$0xf]
        %v617 = vld [vmem:[%s609 + $0x1c] sm:$0xf]
        %v618 = vld [vmem:[%s609 + $0x20] sm:$0xf]
        %v619 = vld [vmem:[%s609 + $0x24] sm:$0xf]
        %v620 = vld [vmem:[%s609 + $0x28] sm:$0xf]
        %v621 = vld [vmem:[%s609 + $0x2c] sm:$0xf]
        %v622 = vld [vmem:[%s609 + $0x30] sm:$0xf]
        %v623 = vld [vmem:[%s609 + $0x34] sm:$0xf]
        %v624 = vld [vmem:[%s609 + $0x38] sm:$0xf]
        %v625 = vld [vmem:[%s609 + $0x3c] sm:$0xf]
        %s626 = scalar_lea.vmem %s2, 1
        %v627 = vld [vmem:[%s626] sm:$0x1]
        %v629 = vlaneseq
        %v630 = vshrl.u32 %v629, 7
        %v631 = vsub.s32 0, %v630
        %v632 = vrot.slane %v627, %v631
        %v650 = vunpack.c.l.b16 %v610
        %v651 = vunpack.c.l.b16 %v611
        %v652 = vunpack.c.l.b16 %v612
        %v653 = vunpack.c.l.b16 %v613
        %v654 = vunpack.c.l.b16 %v614
        %v655 = vunpack.c.l.b16 %v615
        %v656 = vunpack.c.l.b16 %v616
        %v657 = vunpack.c.l.b16 %v617
        %v658 = vunpack.c.l.b16 %v618
        %v659 = vunpack.c.l.b16 %v619
        %v660 = vunpack.c.l.b16 %v620
        %v661 = vunpack.c.l.b16 %v621
        %v662 = vunpack.c.l.b16 %v622
        %v663 = vunpack.c.l.b16 %v623
        %v664 = vunpack.c.l.b16 %v624
        %v665 = vunpack.c.l.b16 %v625
        %v666 = vpack.c.b16 %v651, %v650
        %v667 = vpack.c.b16 %v653, %v652
        %v668 = vpack.c.b16 %v655, %v654
        %v669 = vpack.c.b16 %v657, %v656
        %v670 = vpack.c.b16 %v659, %v658
        %v671 = vpack.c.b16 %v661, %v660
        %v672 = vpack.c.b16 %v663, %v662
        %v673 = vpack.c.b16 %v665, %v664
        %682 = vmatprep.subr.bf16.mxu0 0
        %683 = vmatpush1.bf16.msra.mxu0 %v673
        %684 = vmatprep.subr.bf16.mxu0 0
        %685 = vmatpush1.bf16.msra.mxu0 %v672
        %686 = vmatprep.subr.bf16.mxu0 0
        %687 = vmatpush1.bf16.msra.mxu0 %v671
        %688 = vmatprep.subr.bf16.mxu0 0
        %689 = vmatpush1.bf16.msra.mxu0 %v670
        %690 = vmatprep.subr.bf16.mxu0 0
        %691 = vmatpush1.bf16.msra.mxu0 %v669
        %692 = vmatprep.subr.bf16.mxu0 0
        %693 = vmatpush1.bf16.msra.mxu0 %v668
        %694 = vmatprep.subr.bf16.mxu0 0
        %695 = vmatpush1.bf16.msra.mxu0 %v667
        %696 = vmatprep.subr.bf16.mxu0 0
        %697 = vmatpush1.bf16.msra.mxu0 %v666
        %698 = vmatprep.subr.bf16.mxu0 0
        %699 = vmatpush2.bf16.msra.mxu0 0
        %700 = vmatprep.subr.bf16.mxu0 0
        %701 = vmatpush2.bf16.msra.mxu0 0
        %702 = vmatprep.subr.bf16.mxu0 0
        %703 = vmatpush2.bf16.msra.mxu0 0
        %704 = vmatprep.subr.bf16.mxu0 0
        %705 = vmatpush2.bf16.msra.mxu0 0
        %706 = vmatprep.subr.bf16.mxu0 0
        %707 = vmatpush2.bf16.msra.mxu0 0
        %708 = vmatprep.subr.bf16.mxu0 0
        %709 = vmatpush2.bf16.msra.mxu0 0
        %710 = vmatprep.subr.bf16.mxu0 0
        %711 = vmatpush2.bf16.msra.mxu0 0
        %712 = vmatprep.subr.bf16.mxu0 0
        %713 = vmatpush2.bf16.msra.mxu0 0
        %714 = vmatprep.mubr.bf16.mxu0 0
        %715 = vmatmul.mubr.bf16.gmra.mxu0 %v378
        %v716 = vpop.f32.mrf.mxu0
        %v717 = vadd.f32 %v632, %v716
        %v718 = vpop.f32.mrf.mxu0
        %v719 = vpop.f32.mrf.mxu0
        %v720 = vadd.f32 %v632, %v719
        %v721 = vpop.f32.mrf.mxu0
        %722 = vdwg.mxu0
        %v723 = vxor.u32 %v717, 2147483648
        %v724 = vxor.u32 %v720, 2147483648
        %v725 = vmul.f32 %v723, 1.442695
        %v726 = vpow.pop %v725
        %v727 = vmul.f32 %v724, 1.442695
        %v728 = vpow.pop %v727
        %v729 = vadd.f32 %v726, 1.0
        %v730 = vadd.f32 %v728, 1.0
        %v731 = vrcp.pop %v729
        %v732 = vmul.f32 1.0, %v731
        %v733 = vrcp.pop %v730
        %v734 = vmul.f32 1.0, %v733
        %s735 = smul.u32 %s252, 16
        %s736 = scalar_lea.vmem [#allocation3], %s735
        %737 = vst [vmem:[%s736] sm:$0xff] %v606
        %738 = vst [vmem:[%s736 + $0x8] sm:$0xff] %v608
        %v739 = vsub.f32 1.0, %v606
        %v740 = vsub.f32 1.0, %v608
        %v741 = vmul.f32 %v739, %v478
        %v742 = vmul.f32 %v740, %v481
        %s743 = scalar_lea.vmem [#allocation4], %s735
        %744 = vst [vmem:[%s743] sm:$0xff] %v741
        %745 = vst [vmem:[%s743 + $0x8] sm:$0xff] %v742
        %s746 = scalar_lea.vmem [#allocation5], %s735
        %747 = vst [vmem:[%s746] sm:$0xff] %v732
        %748 = vst [vmem:[%s746 + $0x8] sm:$0xff] %v734
        %s749 = scalar_lea.vmem [#allocation10], 192
        %v750 = vld [vmem:[%s749] sm:$0xf]
        %v751 = vld [vmem:[%s749 + $0x4] sm:$0xf]
        %v752 = vld [vmem:[%s749 + $0x8] sm:$0xf]
        %v753 = vld [vmem:[%s749 + $0xc] sm:$0xf]
        %v754 = vld [vmem:[%s749 + $0x10] sm:$0xf]
        %v755 = vld [vmem:[%s749 + $0x14] sm:$0xf]
        %v756 = vld [vmem:[%s749 + $0x18] sm:$0xf]
        %v757 = vld [vmem:[%s749 + $0x1c] sm:$0xf]
        %v758 = vld [vmem:[%s749 + $0x20] sm:$0xf]
        %v759 = vld [vmem:[%s749 + $0x24] sm:$0xf]
        %v760 = vld [vmem:[%s749 + $0x28] sm:$0xf]
        %v761 = vld [vmem:[%s749 + $0x2c] sm:$0xf]
        %v762 = vld [vmem:[%s749 + $0x30] sm:$0xf]
        %v763 = vld [vmem:[%s749 + $0x34] sm:$0xf]
        %v764 = vld [vmem:[%s749 + $0x38] sm:$0xf]
        %v765 = vld [vmem:[%s749 + $0x3c] sm:$0xf]
        %v782 = vunpack.c.l.b16 %v750
        %v783 = vunpack.c.l.b16 %v751
        %v784 = vunpack.c.l.b16 %v752
        %v785 = vunpack.c.l.b16 %v753
        %v786 = vunpack.c.l.b16 %v754
        %v787 = vunpack.c.l.b16 %v755
        %v788 = vunpack.c.l.b16 %v756
        %v789 = vunpack.c.l.b16 %v757
        %v790 = vunpack.c.l.b16 %v758
        %v791 = vunpack.c.l.b16 %v759
        %v792 = vunpack.c.l.b16 %v760
        %v793 = vunpack.c.l.b16 %v761
        %v794 = vunpack.c.l.b16 %v762
        %v795 = vunpack.c.l.b16 %v763
        %v796 = vunpack.c.l.b16 %v764
        %v797 = vunpack.c.l.b16 %v765
        %v798 = vpack.c.b16 %v783, %v782
        %v799 = vpack.c.b16 %v785, %v784
        %v800 = vpack.c.b16 %v787, %v786
        %v801 = vpack.c.b16 %v789, %v788
        %v802 = vpack.c.b16 %v791, %v790
        %v803 = vpack.c.b16 %v793, %v792
        %v804 = vpack.c.b16 %v795, %v794
        %v805 = vpack.c.b16 %v797, %v796
        %814 = vmatprep.subr.bf16.mxu0 0
        %815 = vmatpush1.bf16.msra.mxu0 %v805
        %816 = vmatprep.subr.bf16.mxu0 0
        %817 = vmatpush1.bf16.msra.mxu0 %v804
        %818 = vmatprep.subr.bf16.mxu0 0
        %819 = vmatpush1.bf16.msra.mxu0 %v803
        %820 = vmatprep.subr.bf16.mxu0 0
        %821 = vmatpush1.bf16.msra.mxu0 %v802
        %822 = vmatprep.subr.bf16.mxu0 0
        %823 = vmatpush1.bf16.msra.mxu0 %v801
        %824 = vmatprep.subr.bf16.mxu0 0
        %825 = vmatpush1.bf16.msra.mxu0 %v800
        %826 = vmatprep.subr.bf16.mxu0 0
        %827 = vmatpush1.bf16.msra.mxu0 %v799
        %828 = vmatprep.subr.bf16.mxu0 0
        %829 = vmatpush1.bf16.msra.mxu0 %v798
        %830 = vmatprep.subr.bf16.mxu0 0
        %831 = vmatpush2.bf16.msra.mxu0 0
        %832 = vmatprep.subr.bf16.mxu0 0
        %833 = vmatpush2.bf16.msra.mxu0 0
        %834 = vmatprep.subr.bf16.mxu0 0
        %835 = vmatpush2.bf16.msra.mxu0 0
        %836 = vmatprep.subr.bf16.mxu0 0
        %837 = vmatpush2.bf16.msra.mxu0 0
        %838 = vmatprep.subr.bf16.mxu0 0
        %839 = vmatpush2.bf16.msra.mxu0 0
        %840 = vmatprep.subr.bf16.mxu0 0
        %841 = vmatpush2.bf16.msra.mxu0 0
        %842 = vmatprep.subr.bf16.mxu0 0
        %843 = vmatpush2.bf16.msra.mxu0 0
        %844 = vmatprep.subr.bf16.mxu0 0
        %845 = vmatpush2.bf16.msra.mxu0 0
        %846 = vmatprep.mubr.bf16.mxu0 0
        %847 = vmatmul.mubr.bf16.gmra.mxu0 %v378
        %v848 = vpop.f32.mrf.mxu0
        %v849 = vadd.f32 0.0, %v848
        %v850 = vpop.f32.mrf.mxu0
        %v851 = vpop.f32.mrf.mxu0
        %v852 = vadd.f32 0.0, %v851
        %v853 = vpop.f32.mrf.mxu0
        %854 = vdwg.mxu0
        %s855 = scalar_lea.vmem [#allocation6], %s735
        %856 = vst [vmem:[%s855] sm:$0xff] %v849
        %857 = vst [vmem:[%s855 + $0x8] sm:$0xff] %v852
        %s858 = sand.u32 %s123, 1
        %s859 = scalar_lea.sflag [#allocation9], %s858
        %s860 = sand.u32 %s123, 1
        %s861 = smul.addr %s860, 8
        %s862 = scalar_lea.vmem [#allocation12], %s861
        // Predicated region
        $region41: #{tpu_custom_call.1} parent=31 // pred_check
          %p863 = pneg %p133
        $region42: #{tpu_custom_call.1} parent=31 // pred_check_branch
          %865 = sbr.rel (%p863) target = $region44
        $region43: #{tpu_custom_call.1} parent=31 // pred_region
          %s866 = ssub.s32 %s26, 1
          %p867 = scmp.gt.s32.totalorder %s866, 0
          %s868 = scalar_select %p867, %s866, 0
          %s869 = smul.u32 2, %s25
          %s871 = ssub.s32 128, 128
          %872 = vsyncadd %s859, %s871
          %s873 = sadd.s32 %s868, %s869
          %s874 = smul.addr %s873, 64
          %s875 = scalar_lea.hbm %s3, %s874
          %s876 = sshll.u32 %s862, 4
          %s877 = int_to_ptr.vmem [resolvable:$true] %s876
          %882 = dma.vmem_to_hbm [thread:$0]  %s877, 128, %s875, %s859, 64, 64, 4
        $region44: #{tpu_custom_call.1} parent=31 // pred_fallthru
          _
      $region32: #{tpu_custom_call.1} parent=5 // pred_fallthru
        _
      %p883 = scmp.le.s32.totalorder 2, %s16
      // Predicated region
      $region45: #{tpu_custom_call.1} parent=5 // pred_check
        %p884 = pneg %p883
      $region46: #{tpu_custom_call.1} parent=5 // pred_check_branch
        %886 = sbr.rel (%p884) target = $region48
      $region47: #{tpu_custom_call.1} parent=5 // pred_region
        %s887 = ssub.s32 %s16, 2
        // Predicated region
        $region49: #{tpu_custom_call.1} parent=47 // pred_check
          %p888 = pneg %p139
        $region50: #{tpu_custom_call.1} parent=47 // pred_check_branch
          %890 = sbr.rel (%p888) target = $region52
        $region51: #{tpu_custom_call.1} parent=47 // pred_region
          %s891 = sand.u32 %s124, 1
          %s892 = scalar_lea.sflag [#allocation9], %s891
          %s893 = sand.u32 %s124, 1
          %s894 = smul.addr %s893, 8
          %s895 = scalar_lea.vmem [#allocation12], %s894
          %896 = dma.done %s892, 128
        $region52: #{tpu_custom_call.1} parent=47 // pred_fallthru
          _
      $region48: #{tpu_custom_call.1} parent=5 // pred_fallthru
        _
    $region6: #{tpu_custom_call.1} parent=1 // loop_footer
      %s20 = sadd.s32 1, %s16
    $region7: #{tpu_custom_call.1} parent=1 // loop_footer_branch
      %15 = sbr.rel target = $region3
    $region8: #{tpu_custom_call.1} parent=1 // loop_exit
      _
    %897 = vsyncpa [#allocation8], 1
    %s898 = scalar_lea.sflag [#allocation8], 1
    %899 = vsyncpa %s898, 1
    %900 = vsyncpa [#allocation11], 1
    %901 = vsyncpa [#allocation9], 1
    %s902 = scalar_lea.sflag [#allocation9], 1
    %903 = vsyncpa %s902, 1

</llo_original>
